<compile_context>
chip_gen: v7x
topology: tpu7x:2x2x1
jax: 0.10.0
libtpu: 0.0.40
codegen_flags: <defaults>
</compile_context>

<pallas_src>
import functools

import jax
import jax.numpy as jnp
from jax.experimental import pallas as pl
from jax.experimental.pallas import tpu as pltpu

_LANE = 128
_DEFAULT_TILE_B = 64 * 1024            # lanes per grid step (multiple of 512)
_VMEM_LIMIT_BYTES = 48 * 1024 * 1024   # safely below v7x's 64 MiB physical VMEM


def _device_kind():
    try:
        return jax.devices()[0].device_kind.lower()
    except Exception:
        return ""


def _default_tanh_dtype():
    # v6e/v7x EUP runs bf16 transcendentals ~2x faster than f32 and EUP is this
    # kernel's binding slot; v5e and older have no bf16 EUP -> keep f32.
    kind = _device_kind()
    if any(tag in kind for tag in ("v6", "v7", "trillium")):
        return "bfloat16"
    return "float32"


def _tile_cap():
    # v7x has 64 MiB VMEM (vs 128 MiB on v5e/v6e): keep the batch tile modest there.
    return 64 * 1024 if "v7" in _device_kind() else 256 * 1024


def _choose_tiling(batch, tile_b):
    """Pick (tile, grid_steps, padded_batch).

    tile is lane-aligned (512-lane granule once the batch is big enough, which is
    DMA-friendlier), tile <= ~tile_b, and the grid has >=2 steps whenever the batch
    allows it so both v7x TensorCores get work under dimension_semantics=("parallel",).
    """
    b128 = max(_LANE, pl.cdiv(batch, _LANE) * _LANE)
    granule = 512 if b128 >= 2 * 512 else _LANE
    bg = pl.cdiv(b128, granule) * granule
    max_tiles = bg // granule
    n = max(pl.cdiv(bg, tile_b), min(2, max_tiles))
    tile = pl.cdiv(bg // granule, n) * granule
    n = pl.cdiv(bg, tile)
    return tile, n, n * tile


def _mlp_kernel(x_ref, p_ref, o_ref, *, tanh_in_bf16):
    """One batch tile of the 3->8->8->1 tanh MLP in transposed layout.

    x_ref: (3, T)  float32 — features on sublanes, batch on lanes
    p_ref: (8, 16) float32 — packed parameters (see pack_params)
    o_ref: (1, T)  float32 — lane-dense output tile
    """
    x = x_ref[...]            # (3, T)
    P = p_ref[...]            # (8, 16)
    T = x.shape[1]

    w1 = P[:, 0:3]            # (8, 3)  layer-1 weight (out, in)
    b1 = P[:, 3:4]            # (8, 1)
    w2 = P[:, 4:12]           # (8, 8)  layer-2 weight (out, in)
    b2 = P[:, 12:13]          # (8, 1)
    w3 = P[:, 13:14]          # (8, 1)  layer-3 weight stored as a column (in, 1)
    b3 = P[0:1, 14:15]        # (1, 1)

    def act(h):
        # bf16 tanh halves the EUP time on v6e/v7x; FMAs / reduce stay in f32.
        if tanh_in_bf16:
            return jnp.tanh(h.astype(jnp.bfloat16)).astype(jnp.float32)
        return jnp.tanh(h)

    # Layer 1: tanh(W1 @ x + b1) as 3 unrolled broadcast FMAs on the VPU
    # (a K=3, N=8 matmul would waste >99% of the MXU).
    h = jnp.broadcast_to(b1, (8, T))
    for k in range(3):
        h = h + w1[:, k:k + 1] * x[k:k + 1, :]
    h1 = act(h)

    # Layer 2: tanh(W2 @ h1 + b2), 8 unrolled broadcast FMAs.
    h = jnp.broadcast_to(b2, (8, T))
    for k in range(8):
        h = h + w2[:, k:k + 1] * h1[k:k + 1, :]
    h2 = act(h)

    # Layer 3: W3 @ h2 + b3 — sublane reduction (XLU slot, effectively free).
    out = jnp.sum(w3 * h2, axis=0, keepdims=True) + b3   # (1, T)
    o_ref[...] = out.astype(o_ref.dtype)


def pack_params(params):
    """Pack torch-style params (w:(out,in), b:(out,)) into one (8,16) f32 block."""
    w1, b1, w2, b2, w3, b3 = params
    p = jnp.zeros((8, 16), jnp.float32)
    p = p.at[:, 0:3].set(w1.astype(jnp.float32))       # (8, 3)
    p = p.at[:, 3].set(b1.astype(jnp.float32))         # (8,)
    p = p.at[:, 4:12].set(w2.astype(jnp.float32))      # (8, 8)
    p = p.at[:, 12].set(b2.astype(jnp.float32))        # (8,)
    p = p.at[:, 13].set(w3[0].astype(jnp.float32))     # (8,)  == W3^T column
    p = p.at[0, 14].set(b3[0].astype(jnp.float32))     # scalar
    return p


@functools.partial(jax.jit, static_argnames=("tile_b", "tanh_dtype", "feature_major"))
def _forward_impl(x, params, *, tile_b, tanh_dtype, feature_major):
    if feature_major:
        F, B = x.shape        # x is (3, B): fast path, no transpose needed
    else:
        B, F = x.shape        # x is (B, 3): torch layout
    assert F == 3, "MetricsCombiner expects 3 input metrics"

    tile, grid_n, b_pad = _choose_tiling(B, tile_b)
    packed = pack_params(params)

    # Pad/transpose stay INSIDE this jit (single program, no extra dispatch).
    xf = x.astype(jnp.float32)
    x_t = xf if feature_major else xf.T                  # (3, B)
    x_t = jnp.pad(x_t, ((0, 0), (0, b_pad - B)))         # batch on lanes, zero-padded

    kernel = functools.partial(_mlp_kernel, tanh_in_bf16=(tanh_dtype == "bfloat16"))

    cost = pl.CostEstimate(
        flops=192 * b_pad,            # (24 + 64 + 8) FMAs + reduce per element
        transcendentals=16 * b_pad,   # two 8-wide tanh per element
        bytes_accessed=16 * b_pad,    # 12 B in + 4 B out per element
    )

    out_t = pl.pallas_call(
        kernel,
        out_shape=jax.ShapeDtypeStruct((1, b_pad), jnp.float32),
        grid_spec=pltpu.PrefetchScalarGridSpec(
            num_scalar_prefetch=0,
            grid=(grid_n,),
            in_specs=[
                # NOTE: pipeline_mode=pl.Buffered(3) here is a further small win once
                # profiling shows exposed DMA at large tiles; default depth kept for
                # portability.
                pl.BlockSpec((3, tile), lambda i: (0, i)),   # x tile (batch on lanes)
                pl.BlockSpec((8, 16), lambda i: (0, 0)),     # packed params, resident
            ],
            out_specs=pl.BlockSpec((1, tile), lambda i: (0, i)),  # lane-dense output
        ),
        compiler_params=pltpu.CompilerParams(
            dimension_semantics=("parallel",),   # v7x: >=2 grid steps -> both TCs busy
            vmem_limit_bytes=_VMEM_LIMIT_BYTES,
        ),
        cost_estimate=cost,
    )(x_t, packed)

    # Final slice/reshape also stays in this jit (no separate HBM pass / dispatch).
    return out_t[0, :B][:, None]


def metrics_combiner_forward(x, params, *, tile_b=None, tanh_dtype=None,
                             feature_major=False):
    """Forward pass of MetricsCombiner.

    x: (B, 3) (torch layout) or, with feature_major=True, (3, B) — the feature-major
       path skips the wrapper-side transpose entirely (preferred for large batches).
    Returns (B, 1) float32.
    """
    if tile_b is None:
        tile_b = _DEFAULT_TILE_B
    tile_b = max(_LANE, (int(tile_b) // _LANE) * _LANE)
    tile_b = min(tile_b, _tile_cap())
    if tanh_dtype is None:
        tanh_dtype = _default_tanh_dtype()
    return _forward_impl(x, tuple(params), tile_b=tile_b,
                         tanh_dtype=str(tanh_dtype), feature_major=bool(feature_major))


def metrics_combiner(x, params, *, min_kernel_batch=1024, **kw):
    """Dispatcher: for tiny batches the fixed pallas_call overhead dominates, so plain
    XLA is faster; the kernel pays off at scale."""
    feature_major = kw.get("feature_major", False)
    batch = x.shape[1] if feature_major else x.shape[0]
    if batch < min_kernel_batch:
        xb = x.T if feature_major else x
        return reference_forward(xb, params)
    return metrics_combiner_forward(x, params, **kw)


def init_params(key):
    """Deterministic PyTorch-style init: U(-1/sqrt(fan_in), 1/sqrt(fan_in)).
    Weights are (out_features, in_features), biases (out_features,), matching torch."""
    ks = jax.random.split(key, 6)

    def lin(kw, kb, fan_in, fan_out):
        bound = 1.0 / float(fan_in) ** 0.5
        w = jax.random.uniform(kw, (fan_out, fan_in), jnp.float32, -bound, bound)
        b = jax.random.uniform(kb, (fan_out,), jnp.float32, -bound, bound)
        return w, b

    w1, b1 = lin(ks[0], ks[1], 3, 8)
    w2, b2 = lin(ks[2], ks[3], 8, 8)
    w3, b3 = lin(ks[4], ks[5], 8, 1)
    return (w1, b1, w2, b2, w3, b3)


def reference_forward(x, params):
    w1, b1, w2, b2, w3, b3 = params
    h1 = jnp.tanh(x @ w1.T + b1)
    h2 = jnp.tanh(h1 @ w2.T + b2)
    return h2 @ w3.T + b3


if __name__ == "__main__":
    key = jax.random.PRNGKey(0)
    kx, kp = jax.random.split(key)
    params = init_params(kp)

    # Small demo batch of language-pair metric triples (3 metrics each).
    B = 16
    x = jax.random.uniform(kx, (B, 3), jnp.float32)

    # 1) f32-tanh kernel path: exact match against the pure-JAX reference.
    out = jax.block_until_ready(
        metrics_combiner_forward(x, params, tanh_dtype="float32"))
    ref = reference_forward(x, params)
    assert out.shape == (B, 1)
    assert jnp.allclose(out, ref, atol=1e-5, rtol=1e-5)

    # 2) Ragged batch spanning multiple 128-lane tiles -> grid of >=2 steps
    #    (exercises the multi-TC "parallel" axis on v7x).
    B2 = 300
    x2 = jax.random.uniform(jax.random.PRNGKey(1), (B2, 3), jnp.float32)
    out2 = jax.block_until_ready(
        metrics_combiner_forward(x2, params, tanh_dtype="float32"))
    ref2 = reference_forward(x2, params)
    assert out2.shape == (B2, 1)
    assert jnp.allclose(out2, ref2, atol=1e-5, rtol=1e-5)

    # 3) Feature-major (3, B) fast path (no wrapper transpose) + auto tanh dtype
    #    (bf16 on v6e/v7x, f32 on v5e) -> loose tolerance covers the bf16 case.
    x3 = x2.T
    out3 = jax.block_until_ready(
        metrics_combiner_forward(x3, params, feature_major=True))
    assert out3.shape == (B2, 1)
    assert jnp.allclose(out3, ref2, atol=1e-1, rtol=0.0)

    print("KERNEL_OK")
</pallas_src>

<mosaic_0001>
module attributes {stable_mosaic.version = 11 : i64} {
  func.func @_mlp_kernel(%arg0: i32, %arg1: memref<3x128xf32, #tpu.memory_space<vmem>>, %arg2: memref<8x16xf32, #tpu.memory_space<vmem>>, %arg3: memref<1x128xf32, #tpu.memory_space<vmem>>) attributes {dimension_semantics = [#tpu.dimension_semantics<parallel>], iteration_bounds = array<i64: 1>, scalar_prefetch = 0 : i64, scratch_operands = 0 : i64, tpu.core_type = #tpu.core_type<tc>, window_params = [{transform_indices = @transform_0, window_bounds = array<i64: 3, 128>}, {pipeline_mode = #tpu.pipeline_mode<synchronous>, transform_indices = @transform_1, window_bounds = array<i64: 8, 16>}, {transform_indices = @transform_2, window_bounds = array<i64: 1, 128>}]} {
    %c0 = arith.constant 0 : index
    %c0_0 = arith.constant 0 : index
    %0 = vector.load %arg1[%c0, %c0_0] : memref<3x128xf32, #tpu.memory_space<vmem>>, vector<3x128xf32>
    %c0_1 = arith.constant 0 : index
    %c0_2 = arith.constant 0 : index
    %1 = vector.load %arg2[%c0_1, %c0_2] : memref<8x16xf32, #tpu.memory_space<vmem>>, vector<8x16xf32>
    %2 = vector.extract_strided_slice %1 {offsets = [0, 0], sizes = [8, 3], strides = [1, 1]} : vector<8x16xf32> to vector<8x3xf32>
    %3 = vector.extract_strided_slice %1 {offsets = [0, 3], sizes = [8, 1], strides = [1, 1]} : vector<8x16xf32> to vector<8x1xf32>
    %4 = vector.extract_strided_slice %1 {offsets = [0, 4], sizes = [8, 8], strides = [1, 1]} : vector<8x16xf32> to vector<8x8xf32>
    %5 = vector.extract_strided_slice %1 {offsets = [0, 12], sizes = [8, 1], strides = [1, 1]} : vector<8x16xf32> to vector<8x1xf32>
    %6 = vector.extract_strided_slice %1 {offsets = [0, 13], sizes = [8, 1], strides = [1, 1]} : vector<8x16xf32> to vector<8x1xf32>
    %7 = vector.extract_strided_slice %1 {offsets = [0, 14], sizes = [1, 1], strides = [1, 1]} : vector<8x16xf32> to vector<1x1xf32>
    %8 = vector.shape_cast %3 : vector<8x1xf32> to vector<8x1xf32>
    %9 = vector.broadcast %8 : vector<8x1xf32> to vector<8x128xf32>
    %10 = vector.extract_strided_slice %2 {offsets = [0, 0], sizes = [8, 1], strides = [1, 1]} : vector<8x3xf32> to vector<8x1xf32>
    %11 = vector.extract_strided_slice %0 {offsets = [0, 0], sizes = [1, 128], strides = [1, 1]} : vector<3x128xf32> to vector<1x128xf32>
    %12 = vector.broadcast %10 : vector<8x1xf32> to vector<8x128xf32>
    %13 = vector.broadcast %11 : vector<1x128xf32> to vector<8x128xf32>
    %14 = arith.mulf %12, %13 : vector<8x128xf32>
    %15 = arith.addf %9, %14 : vector<8x128xf32>
    %16 = vector.extract_strided_slice %2 {offsets = [0, 1], sizes = [8, 1], strides = [1, 1]} : vector<8x3xf32> to vector<8x1xf32>
    %17 = vector.extract_strided_slice %0 {offsets = [1, 0], sizes = [1, 128], strides = [1, 1]} : vector<3x128xf32> to vector<1x128xf32>
    %18 = vector.broadcast %16 : vector<8x1xf32> to vector<8x128xf32>
    %19 = vector.broadcast %17 : vector<1x128xf32> to vector<8x128xf32>
    %20 = arith.mulf %18, %19 : vector<8x128xf32>
    %21 = arith.addf %15, %20 : vector<8x128xf32>
    %22 = vector.extract_strided_slice %2 {offsets = [0, 2], sizes = [8, 1], strides = [1, 1]} : vector<8x3xf32> to vector<8x1xf32>
    %23 = vector.extract_strided_slice %0 {offsets = [2, 0], sizes = [1, 128], strides = [1, 1]} : vector<3x128xf32> to vector<1x128xf32>
    %24 = vector.broadcast %22 : vector<8x1xf32> to vector<8x128xf32>
    %25 = vector.broadcast %23 : vector<1x128xf32> to vector<8x128xf32>
    %26 = arith.mulf %24, %25 : vector<8x128xf32>
    %27 = arith.addf %21, %26 : vector<8x128xf32>
    %28 = math.tanh %27 : vector<8x128xf32>
    %29 = vector.shape_cast %5 : vector<8x1xf32> to vector<8x1xf32>
    %30 = vector.broadcast %29 : vector<8x1xf32> to vector<8x128xf32>
    %31 = vector.extract_strided_slice %4 {offsets = [0, 0], sizes = [8, 1], strides = [1, 1]} : vector<8x8xf32> to vector<8x1xf32>
    %32 = vector.extract_strided_slice %28 {offsets = [0, 0], sizes = [1, 128], strides = [1, 1]} : vector<8x128xf32> to vector<1x128xf32>
    %33 = vector.broadcast %31 : vector<8x1xf32> to vector<8x128xf32>
    %34 = vector.broadcast %32 : vector<1x128xf32> to vector<8x128xf32>
    %35 = arith.mulf %33, %34 : vector<8x128xf32>
    %36 = arith.addf %30, %35 : vector<8x128xf32>
    %37 = vector.extract_strided_slice %4 {offsets = [0, 1], sizes = [8, 1], strides = [1, 1]} : vector<8x8xf32> to vector<8x1xf32>
    %38 = vector.extract_strided_slice %28 {offsets = [1, 0], sizes = [1, 128], strides = [1, 1]} : vector<8x128xf32> to vector<1x128xf32>
    %39 = vector.broadcast %37 : vector<8x1xf32> to vector<8x128xf32>
    %40 = vector.broadcast %38 : vector<1x128xf32> to vector<8x128xf32>
    %41 = arith.mulf %39, %40 : vector<8x128xf32>
    %42 = arith.addf %36, %41 : vector<8x128xf32>
    %43 = vector.extract_strided_slice %4 {offsets = [0, 2], sizes = [8, 1], strides = [1, 1]} : vector<8x8xf32> to vector<8x1xf32>
    %44 = vector.extract_strided_slice %28 {offsets = [2, 0], sizes = [1, 128], strides = [1, 1]} : vector<8x128xf32> to vector<1x128xf32>
    %45 = vector.broadcast %43 : vector<8x1xf32> to vector<8x128xf32>
    %46 = vector.broadcast %44 : vector<1x128xf32> to vector<8x128xf32>
    %47 = arith.mulf %45, %46 : vector<8x128xf32>
    %48 = arith.addf %42, %47 : vector<8x128xf32>
    %49 = vector.extract_strided_slice %4 {offsets = [0, 3], sizes = [8, 1], strides = [1, 1]} : vector<8x8xf32> to vector<8x1xf32>
    %50 = vector.extract_strided_slice %28 {offsets = [3, 0], sizes = [1, 128], strides = [1, 1]} : vector<8x128xf32> to vector<1x128xf32>
    %51 = vector.broadcast %49 : vector<8x1xf32> to vector<8x128xf32>
    %52 = vector.broadcast %50 : vector<1x128xf32> to vector<8x128xf32>
    %53 = arith.mulf %51, %52 : vector<8x128xf32>
    %54 = arith.addf %48, %53 : vector<8x128xf32>
    %55 = vector.extract_strided_slice %4 {offsets = [0, 4], sizes = [8, 1], strides = [1, 1]} : vector<8x8xf32> to vector<8x1xf32>
    %56 = vector.extract_strided_slice %28 {offsets = [4, 0], sizes = [1, 128], strides = [1, 1]} : vector<8x128xf32> to vector<1x128xf32>
    %57 = vector.broadcast %55 : vector<8x1xf32> to vector<8x128xf32>
    %58 = vector.broadcast %56 : vector<1x128xf32> to vector<8x128xf32>
    %59 = arith.mulf %57, %58 : vector<8x128xf32>
    %60 = arith.addf %54, %59 : vector<8x128xf32>
    %61 = vector.extract_strided_slice %4 {offsets = [0, 5], sizes = [8, 1], strides = [1, 1]} : vector<8x8xf32> to vector<8x1xf32>
    %62 = vector.extract_strided_slice %28 {offsets = [5, 0], sizes = [1, 128], strides = [1, 1]} : vector<8x128xf32> to vector<1x128xf32>
    %63 = vector.broadcast %61 : vector<8x1xf32> to vector<8x128xf32>
    %64 = vector.broadcast %62 : vector<1x128xf32> to vector<8x128xf32>
    %65 = arith.mulf %63, %64 : vector<8x128xf32>
    %66 = arith.addf %60, %65 : vector<8x128xf32>
    %67 = vector.extract_strided_slice %4 {offsets = [0, 6], sizes = [8, 1], strides = [1, 1]} : vector<8x8xf32> to vector<8x1xf32>
    %68 = vector.extract_strided_slice %28 {offsets = [6, 0], sizes = [1, 128], strides = [1, 1]} : vector<8x128xf32> to vector<1x128xf32>
    %69 = vector.broadcast %67 : vector<8x1xf32> to vector<8x128xf32>
    %70 = vector.broadcast %68 : vector<1x128xf32> to vector<8x128xf32>
    %71 = arith.mulf %69, %70 : vector<8x128xf32>
    %72 = arith.addf %66, %71 : vector<8x128xf32>
    %73 = vector.extract_strided_slice %4 {offsets = [0, 7], sizes = [8, 1], strides = [1, 1]} : vector<8x8xf32> to vector<8x1xf32>
    %74 = vector.extract_strided_slice %28 {offsets = [7, 0], sizes = [1, 128], strides = [1, 1]} : vector<8x128xf32> to vector<1x128xf32>
    %75 = vector.broadcast %73 : vector<8x1xf32> to vector<8x128xf32>
    %76 = vector.broadcast %74 : vector<1x128xf32> to vector<8x128xf32>
    %77 = arith.mulf %75, %76 : vector<8x128xf32>
    %78 = arith.addf %72, %77 : vector<8x128xf32>
    %79 = math.tanh %78 : vector<8x128xf32>
    %80 = vector.broadcast %6 : vector<8x1xf32> to vector<8x128xf32>
    %81 = arith.mulf %80, %79 : vector<8x128xf32>
    %cst = arith.constant dense<0.000000e+00> : vector<128xf32>
    %82 = vector.multi_reduction <add>, %81, %cst [0] : vector<8x128xf32> to vector<128xf32>
    %83 = vector.shape_cast %82 : vector<128xf32> to vector<1x128xf32>
    %84 = vector.broadcast %7 : vector<1x1xf32> to vector<1x128xf32>
    %85 = arith.addf %83, %84 : vector<1x128xf32>
    %c0_3 = arith.constant 0 : index
    %c0_4 = arith.constant 0 : index
    %86 = vector.load %arg3[%c0_3, %c0_4] : memref<1x128xf32, #tpu.memory_space<vmem>>, vector<1x128xf32>
    tpu.vector_store %arg3[%c0_3, %c0_4], %85 {strides = array<i32>} : memref<1x128xf32, #tpu.memory_space<vmem>>, vector<1x128xf32>,
    return
  }
  func.func @transform_0(%arg0: i32) -> (i32, i32) {
    %c0_i32 = arith.constant 0 : i32
    %c0_i32_0 = arith.constant 0 : i32
    return %c0_i32, %arg0 : i32, i32
  }
  func.func @transform_1(%arg0: i32) -> (i32, i32) {
    %c0_i32 = arith.constant 0 : i32
    %c0_i32_0 = arith.constant 0 : i32
    %c0_i32_1 = arith.constant 0 : i32
    return %c0_i32, %c0_i32_0 : i32, i32
  }
  func.func @transform_2(%arg0: i32) -> (i32, i32) {
    %c0_i32 = arith.constant 0 : i32
    %c0_i32_0 = arith.constant 0 : i32
    return %c0_i32, %arg0 : i32, i32
  }
}

</mosaic_0001>

<llo_original>
// kernel: _forward_impl.1
$region0: #{_forward_impl.1}
  #allocation0 [shape = 'u32[]', space=smem, size = 0x4, offset = 0x4, fixed_abs, tag = 'smem constant byte address 0x4 - core index']
  #allocation1 [shape = 'u32[144,128]{1,0:T(1,128)}', space=vmem, size = 0x12000, scoped, tag = 'internal scratch']
  %s0 = inlined_call_operand.vmem [shape: f32[3,128], index: 0, kind: input, shape index: {}]
  %s1 = inlined_call_operand.vmem [shape: f32[8,16], index: 1, kind: input, shape index: {}]
  %s2 = inlined_call_operand.vmem [shape: f32[1,128], index: 2, kind: output, shape index: {}]
  %s3 = sld [smem:[#allocation0]]
  $region18: #{_forward_impl.1} parent=0
    _
  %s5 = ssub.s32 1, %s3
  %s6 = scalar_select 0, %s5, %s3
  // Predicated region
  $region2: #{_forward_impl.1} parent=0 // pred_check
    _
  $region3: #{_forward_impl.1} parent=0 // pred_check_branch
    %8 = sbr.rel (0) target = $region5
  $region4: #{_forward_impl.1} parent=0 // pred_region
    _
  $region5: #{_forward_impl.1} parent=0 // pred_fallthru
    _
  // Predicated region
  $region6: #{_forward_impl.1} parent=0 // pred_check
    _
  $region7: #{_forward_impl.1} parent=0 // pred_check_branch
    %10 = sbr.rel (0) target = $region9
  $region8: #{_forward_impl.1} parent=0 // pred_region
    _
  $region9: #{_forward_impl.1} parent=0 // pred_fallthru
    _
  %v11 = vld [vmem:[%s0] sm:$0x7]
  %v12 = vld [vmem:[%s1] sm:$0xff]
  %14 = vset.pattern.permute.xlu0 3
  %15 = vperm.xlu0 %14, %v12
  %v16 = vpop.permute.xlu0 %15
  %18 = vset.pattern.permute.xlu0 0
  %19 = vperm.xlu0 %18, %v12
  %v20 = vpop.permute.xlu0 %19
  %v22 = vlaneseq
  %v23 = vshrl.u32 %v22, 7
  %v24 = vsub.s32 0, %v23
  %v25 = vrot.slane %v11, %v24
  %v26 = vmul.f32 %v20, %v25
  %v27 = vadd.f32 %v16, %v26
  %28 = vset.pattern.permute.xlu0 1
  %29 = vperm.xlu0 %28, %v12
  %v30 = vpop.permute.xlu0 %29
  %v32 = vlaneseq
  %v33 = vshrl.u32 %v32, 7
  %v34 = vsub.s32 1, %v33
  %v35 = vrot.slane %v11, %v34
  %v36 = vmul.f32 %v30, %v35
  %v37 = vadd.f32 %v27, %v36
  %38 = vset.pattern.permute.xlu0 2
  %39 = vperm.xlu0 %38, %v12
  %v40 = vpop.permute.xlu0 %39
  %v42 = vlaneseq
  %v43 = vshrl.u32 %v42, 7
  %v44 = vsub.s32 2, %v43
  %v45 = vrot.slane %v11, %v44
  %v46 = vmul.f32 %v40, %v45
  %v47 = vadd.f32 %v37, %v46
  %v48 = vtanh.pop %v47
  %49 = vset.pattern.permute.xlu0 12
  %50 = vperm.xlu0 %49, %v12
  %v51 = vpop.permute.xlu0 %50
  %53 = vset.pattern.permute.xlu0 4
  %54 = vperm.xlu0 %53, %v12
  %v55 = vpop.permute.xlu0 %54
  %v57 = vlaneseq
  %v58 = vshrl.u32 %v57, 7
  %v59 = vsub.s32 0, %v58
  %v60 = vrot.slane %v48, %v59
  %v61 = vmul.f32 %v55, %v60
  %v62 = vadd.f32 %v51, %v61
  %63 = vset.pattern.permute.xlu0 5
  %64 = vperm.xlu0 %63, %v12
  %v65 = vpop.permute.xlu0 %64
  %v67 = vlaneseq
  %v68 = vshrl.u32 %v67, 7
  %v69 = vsub.s32 1, %v68
  %v70 = vrot.slane %v48, %v69
  %v71 = vmul.f32 %v65, %v70
  %v72 = vadd.f32 %v62, %v71
  %73 = vset.pattern.permute.xlu0 6
  %74 = vperm.xlu0 %73, %v12
  %v75 = vpop.permute.xlu0 %74
  %v77 = vlaneseq
  %v78 = vshrl.u32 %v77, 7
  %v79 = vsub.s32 2, %v78
  %v80 = vrot.slane %v48, %v79
  %v81 = vmul.f32 %v75, %v80
  %v82 = vadd.f32 %v72, %v81
  %83 = vset.pattern.permute.xlu0 7
  %84 = vperm.xlu0 %83, %v12
  %v85 = vpop.permute.xlu0 %84
  %v87 = vlaneseq
  %v88 = vshrl.u32 %v87, 7
  %v89 = vsub.s32 3, %v88
  %v90 = vrot.slane %v48, %v89
  %v91 = vmul.f32 %v85, %v90
  %v92 = vadd.f32 %v82, %v91
  %93 = vset.pattern.permute.xlu0 8
  %94 = vperm.xlu0 %93, %v12
  %v95 = vpop.permute.xlu0 %94
  %v97 = vlaneseq
  %v98 = vshrl.u32 %v97, 7
  %v99 = vsub.s32 4, %v98
  %v100 = vrot.slane %v48, %v99
  %v101 = vmul.f32 %v95, %v100
  %v102 = vadd.f32 %v92, %v101
  %103 = vset.pattern.permute.xlu0 9
  %104 = vperm.xlu0 %103, %v12
  %v105 = vpop.permute.xlu0 %104
  %v107 = vlaneseq
  %v108 = vshrl.u32 %v107, 7
  %v109 = vsub.s32 5, %v108
  %v110 = vrot.slane %v48, %v109
  %v111 = vmul.f32 %v105, %v110
  %v112 = vadd.f32 %v102, %v111
  %113 = vset.pattern.permute.xlu0 10
  %114 = vperm.xlu0 %113, %v12
  %v115 = vpop.permute.xlu0 %114
  %v117 = vlaneseq
  %v118 = vshrl.u32 %v117, 7
  %v119 = vsub.s32 6, %v118
  %v120 = vrot.slane %v48, %v119
  %v121 = vmul.f32 %v115, %v120
  %v122 = vadd.f32 %v112, %v121
  %123 = vset.pattern.permute.xlu0 11
  %124 = vperm.xlu0 %123, %v12
  %v125 = vpop.permute.xlu0 %124
  %v127 = vlaneseq
  %v128 = vshrl.u32 %v127, 7
  %v129 = vsub.s32 7, %v128
  %v130 = vrot.slane %v48, %v129
  %v131 = vmul.f32 %v125, %v130
  %v132 = vadd.f32 %v122, %v131
  %v133 = vtanh.pop %v132
  %134 = vset.pattern.permute.xlu0 13
  %135 = vperm.xlu0 %134, %v12
  %v136 = vpop.permute.xlu0 %135
  %v138 = vmul.f32 %v136, %v133
  %v139 = vrot.slane %v138, 4
  %v140 = vadd.f32 %v138, %v139
  %v141 = vrot.slane %v140, 2
  %v142 = vadd.f32 %v140, %v141
  %v143 = vrot.slane %v142, 1
  %v144 = vadd.f32 %v142, %v143
  %145 = vset.pattern.permute.xlu0 14
  %146 = vperm.xlu0 %145, %v12
  %v147 = vpop.permute.xlu0 %146
  %v149 = vadd.f32 %v144, %v147
  %150 = vst [vmem:[%s2] sm:$0x1] %v149
  // Predicated region
  $region10: #{_forward_impl.1} parent=0 // pred_check
    _
  $region11: #{_forward_impl.1} parent=0 // pred_check_branch
    %152 = sbr.rel (0) target = $region13
  $region12: #{_forward_impl.1} parent=0 // pred_region
    _
  $region13: #{_forward_impl.1} parent=0 // pred_fallthru
    _
  // Predicated region
  $region14: #{_forward_impl.1} parent=0 // pred_check
    _
  $region15: #{_forward_impl.1} parent=0 // pred_check_branch
    %154 = sbr.rel (0) target = $region17
  $region16: #{_forward_impl.1} parent=0 // pred_region
    _
  $region17: #{_forward_impl.1} parent=0 // pred_fallthru
    _

</llo_original>
